<compile_context>
chip_gen: v7x
topology: tpu7x:2x2x1
jax: 0.10.0
libtpu: 0.0.40
codegen_flags: <defaults>
</compile_context>

<pallas_src>
import functools

import jax
import jax.numpy as jnp
from jax import lax
from jax.experimental import pallas as pl
from jax.experimental.pallas import tpu as pltpu


def _nrmse_kernel(yhat_ref, y_ref, sum_out, max_out, min_out,
                  sum_acc, max_acc, min_acc,
                  *, b_total, tb, tiles_per_shard, needs_mask):
    i = pl.program_id(1)                 # tile within this shard (reduction axis)
    n = pl.num_programs(1)

    @pl.when(i == 0)
    def _init():
        sum_acc[...] = jnp.zeros(sum_acc.shape, sum_acc.dtype)
        max_acc[...] = jnp.full(max_acc.shape, -jnp.inf, max_acc.dtype)
        min_acc[...] = jnp.full(min_acc.shape, jnp.inf, min_acc.dtype)

    yhat = yhat_ref[...].astype(jnp.float32)
    y = y_ref[...].astype(jnp.float32)

    diff = yhat - y
    # Mandatory per-row (feature-axis) reductions -> (tb, 1).
    mse_row = jnp.mean(diff * diff, axis=1, keepdims=True)
    sqrt_row = jnp.sqrt(mse_row + 1e-8)
    row_max = jnp.max(y, axis=1, keepdims=True)
    row_min = jnp.min(y, axis=1, keepdims=True)

    if needs_mask:
        # Mask AFTER the axis=1 reductions, on (tb,1) vectors only.
        # Select (not multiply), so garbage/NaN padding rows cannot leak.
        p = pl.program_id(0)
        tile0 = (p * tiles_per_shard + i) * tb
        row_ids = tile0 + lax.broadcasted_iota(jnp.int32, (tb, 1), 0)
        valid = row_ids < b_total
        sqrt_row = jnp.where(valid, sqrt_row, 0.0)
        row_max = jnp.where(valid, row_max, -jnp.inf)
        row_min = jnp.where(valid, row_min, jnp.inf)

    # Element-wise (VPU) accumulation into per-row scratch; the cross-sublane
    # collapse happens once per shard in the finalize step.
    sum_acc[...] += sqrt_row
    max_acc[...] = jnp.maximum(max_acc[...], row_max)
    min_acc[...] = jnp.minimum(min_acc[...], row_min)

    @pl.when(i == n - 1)
    def _finalize():
        sum_out[...] = jnp.sum(sum_acc[...], axis=0, keepdims=True).reshape(1, 1, 1)
        max_out[...] = jnp.max(max_acc[...], axis=0, keepdims=True).reshape(1, 1, 1)
        min_out[...] = jnp.min(min_acc[...], axis=0, keepdims=True).reshape(1, 1, 1)


def _round_up(x, m):
    return ((x + m - 1) // m) * m


def _sublane_multiple(*dtypes):
    # Native sublane packing: f32 -> 8 rows/vreg, 16-bit -> 16, 8-bit -> 32.
    m = 8
    for dt in dtypes:
        isz = jnp.dtype(dt).itemsize
        if isz == 2:
            m = max(m, 16)
        elif isz == 1:
            m = max(m, 32)
    return m


def _tpu_budget():
    """Returns (pipeline-buffer budget bytes, vmem_limit_bytes or None)."""
    try:
        info = pltpu.get_tpu_info()
    except Exception:
        return 8 << 20, None                       # unknown: conservative default
    name = ""
    for attr in ("chip_version", "chip_name", "version", "name"):
        v = getattr(info, attr, None)
        if v:
            name = str(v).lower()
            break
    vmem = getattr(info, "vmem_capacity_bytes", None)
    if "v5" in name:
        return 8 << 20, None                       # stay inside v5e's small scoped default
    if "v7" in name or (vmem is not None and vmem <= (64 << 20)):
        return 20 << 20, 44 << 20                  # v7x: only 64 MiB physical VMEM
    return 24 << 20, 56 << 20                      # v6e-class (128 MiB physical)


def _choose_block_rows(B, D, itemsize, sub, budget):
    # 2 streamed inputs x 2 pipeline buffers must fit in `budget`.
    cap = max(budget // (4 * D * itemsize), sub)
    tb_max = max(min((cap // sub) * sub, _round_up(B, sub)), sub)
    if B % sub != 0:
        return tb_max                              # ragged regardless; take biggest tile
    if (B % tb_max == 0 and (B // tb_max) % 2 == 0) or B == tb_max:
        return tb_max
    # Prefer a nearby (>= tb_max/2) sublane-multiple divisor of B so the mask
    # path is never emitted; prefer an even tile count (clean 2-shard split).
    best = tb_max if B % tb_max == 0 else None
    t = tb_max - sub
    while t >= max(sub, tb_max // 2):
        if B % t == 0:
            if best is None:
                best = t
            if (B // t) % 2 == 0:
                return t
        t -= sub
    return best if best is not None else tb_max


def nrmse_loss(yhat: jax.Array, y: jax.Array, block_rows: int | None = None) -> jax.Array:
    assert yhat.shape == y.shape and yhat.ndim == 2
    B, D = yhat.shape
    itemsize = max(jnp.dtype(yhat.dtype).itemsize, jnp.dtype(y.dtype).itemsize)
    sub = _sublane_multiple(yhat.dtype, y.dtype)
    budget, vmem_limit = _tpu_budget()

    if block_rows is None:
        tb = _choose_block_rows(B, D, itemsize, sub, budget)
    else:
        tb = max(_round_up(min(block_rows, _round_up(B, sub)), sub), sub)

    num_tiles = pl.cdiv(B, tb)

    # Leading "parallel" axis: shard the batch tiles across both v7x
    # TensorCores; on 1-TC chips this is just a short outer loop.
    nc = 2 if num_tiles > 1 else 1
    tiles_per_shard = pl.cdiv(num_tiles, nc)
    phantom = nc * tiles_per_shard > num_tiles      # last shard has an empty tile
    needs_mask = (B % tb != 0) or phantom

    if phantom:
        def in_map(p, i):
            # Clamp fully-out-of-range (phantom) tiles onto the last real tile;
            # their rows are discarded by the in-kernel row mask.
            return (jnp.minimum(p * tiles_per_shard + i, num_tiles - 1), 0)
    else:
        def in_map(p, i):
            return (p * tiles_per_shard + i, 0)

    kernel = functools.partial(
        _nrmse_kernel, b_total=B, tb=tb,
        tiles_per_shard=tiles_per_shard, needs_mask=needs_mask)

    cp = dict(dimension_semantics=("parallel", "arbitrary"))
    if vmem_limit is not None:
        cp["vmem_limit_bytes"] = int(vmem_limit)

    part_shape = jax.ShapeDtypeStruct((nc, 1, 1), jnp.float32)
    out_spec = pl.BlockSpec((1, 1, 1), lambda p, i: (p, 0, 0))

    # Note: pipeline_mode=pl.Buffered(3) on the input specs is a cheap follow-up
    # sweep if a profile shows exposed DMA gaps between grid steps (review item 8).
    sums, maxs, mins = pl.pallas_call(
        kernel,
        out_shape=(part_shape, part_shape, part_shape),
        grid_spec=pltpu.PrefetchScalarGridSpec(
            num_scalar_prefetch=0,
            grid=(nc, tiles_per_shard),
            in_specs=[
                pl.BlockSpec((tb, D), in_map),
                pl.BlockSpec((tb, D), in_map),
            ],
            out_specs=(out_spec, out_spec, out_spec),
            scratch_shapes=[
                pltpu.VMEM((tb, 1), jnp.float32),   # per-row running sum of sqrt(mse_row)
                pltpu.VMEM((tb, 1), jnp.float32),   # per-row running max(y)
                pltpu.VMEM((tb, 1), jnp.float32),   # per-row running min(y)
            ],
        ),
        compiler_params=pltpu.CompilerParams(**cp),
    )(yhat, y)

    # Tiny JAX epilogue combining the per-shard partials.
    rmse_mean = jnp.sum(sums) / B
    denom = jnp.max(maxs) - jnp.min(mins)   # 0 for constant y -> inf/nan, as in torch
    return rmse_mean / denom


def _nrmse_ref(yhat, y):
    # Pure-JAX reference mirroring the PyTorch module (computed in f32).
    yhat = yhat.astype(jnp.float32)
    y = y.astype(jnp.float32)
    mse_row = jnp.mean((yhat - y) ** 2, axis=1) + 1e-8
    return jnp.mean(jnp.sqrt(mse_row)) / (jnp.max(y) - jnp.min(y))


if __name__ == "__main__":
    key = jax.random.PRNGKey(0)

    def check(B, D, dtype, block_rows, tol):
        k1, k2 = jax.random.split(jax.random.fold_in(key, B * 131 + D))
        yhat = jax.random.normal(k1, (B, D), dtype=jnp.float32).astype(dtype)
        y = jax.random.normal(k2, (B, D), dtype=jnp.float32).astype(dtype)
        got = jax.block_until_ready(nrmse_loss(yhat, y, block_rows=block_rows))
        want = jax.block_until_ready(_nrmse_ref(yhat, y))
        assert jnp.allclose(got, want, rtol=tol, atol=tol), (B, D, str(dtype), got, want)

    # multi-tile per shard, even split across the 2-way parallel axis, no mask
    check(64, 256, jnp.float32, 16, 1e-5)
    # ragged batch (40 % 16 != 0) + phantom tile on shard 1 -> clamped + masked path
    check(40, 384, jnp.float32, 16, 1e-5)
    # bf16 inputs stay bf16 in HBM; tb rounded up to the bf16 sublane multiple (16)
    check(32, 128, jnp.bfloat16, 8, 1e-5)
    # auto-chosen tile size, single tile / single shard path
    check(24, 128, jnp.float32, None, 1e-5)

    print("KERNEL_OK")
</pallas_src>

<mosaic_0001>
module attributes {stable_mosaic.version = 11 : i64} {
  func.func @_nrmse_kernel(%arg0: i32, %arg1: i32, %arg2: memref<16x256xf32, #tpu.memory_space<vmem>>, %arg3: memref<16x256xf32, #tpu.memory_space<vmem>>, %arg4: memref<1x1x1xf32, #tpu.memory_space<vmem>>, %arg5: memref<1x1x1xf32, #tpu.memory_space<vmem>>, %arg6: memref<1x1x1xf32, #tpu.memory_space<vmem>>, %arg7: memref<16x1xf32, #tpu.memory_space<vmem>>, %arg8: memref<16x1xf32, #tpu.memory_space<vmem>>, %arg9: memref<16x1xf32, #tpu.memory_space<vmem>>) attributes {dimension_semantics = [#tpu.dimension_semantics<parallel>, #tpu.dimension_semantics<arbitrary>], iteration_bounds = array<i64: 2, 2>, scalar_prefetch = 0 : i64, scratch_operands = 3 : i64, tpu.core_type = #tpu.core_type<tc>, window_params = [{transform_indices = @transform_0, window_bounds = array<i64: 16, 256>}, {transform_indices = @transform_1, window_bounds = array<i64: 16, 256>}, {transform_indices = @transform_2, window_bounds = array<i64: 1, 1, 1>}, {transform_indices = @transform_3, window_bounds = array<i64: 1, 1, 1>}, {transform_indices = @transform_4, window_bounds = array<i64: 1, 1, 1>}]} {
    %c0_i32 = arith.constant 0 : i32
    %0 = arith.cmpi eq, %arg1, %c0_i32 : i32
    %1 = arith.extui %0 : i1 to i32
    %c0_i32_0 = arith.constant 0 : i32
    %2 = arith.cmpi ne, %1, %c0_i32_0 : i32
    scf.if %2 {
      %cst_21 = arith.constant 0.000000e+00 : f32
      %30 = vector.broadcast %cst_21 : f32 to vector<16x1xf32>
      %c0_22 = arith.constant 0 : index
      %c0_23 = arith.constant 0 : index
      %31 = vector.load %arg7[%c0_22, %c0_23] : memref<16x1xf32, #tpu.memory_space<vmem>>, vector<16x1xf32>
      tpu.vector_store %arg7[%c0_22, %c0_23], %30 {strides = array<i32>} : memref<16x1xf32, #tpu.memory_space<vmem>>, vector<16x1xf32>,
      %cst_24 = arith.constant 0xFF800000 : f32
      %32 = vector.broadcast %cst_24 : f32 to vector<16x1xf32>
      %c0_25 = arith.constant 0 : index
      %c0_26 = arith.constant 0 : index
      %33 = vector.load %arg8[%c0_25, %c0_26] : memref<16x1xf32, #tpu.memory_space<vmem>>, vector<16x1xf32>
      tpu.vector_store %arg8[%c0_25, %c0_26], %32 {strides = array<i32>} : memref<16x1xf32, #tpu.memory_space<vmem>>, vector<16x1xf32>,
      %cst_27 = arith.constant 0x7F800000 : f32
      %34 = vector.broadcast %cst_27 : f32 to vector<16x1xf32>
      %c0_28 = arith.constant 0 : index
      %c0_29 = arith.constant 0 : index
      %35 = vector.load %arg9[%c0_28, %c0_29] : memref<16x1xf32, #tpu.memory_space<vmem>>, vector<16x1xf32>
      tpu.vector_store %arg9[%c0_28, %c0_29], %34 {strides = array<i32>} : memref<16x1xf32, #tpu.memory_space<vmem>>, vector<16x1xf32>,
    } else {
    }
    %c0 = arith.constant 0 : index
    %c0_1 = arith.constant 0 : index
    %3 = vector.load %arg2[%c0, %c0_1] : memref<16x256xf32, #tpu.memory_space<vmem>>, vector<16x256xf32>
    %c0_2 = arith.constant 0 : index
    %c0_3 = arith.constant 0 : index
    %4 = vector.load %arg3[%c0_2, %c0_3] : memref<16x256xf32, #tpu.memory_space<vmem>>, vector<16x256xf32>
    %5 = arith.subf %3, %4 : vector<16x256xf32>
    %6 = arith.mulf %5, %5 : vector<16x256xf32>
    %cst = arith.constant dense<0.000000e+00> : vector<16xf32>
    %7 = vector.multi_reduction <add>, %6, %cst [1] : vector<16x256xf32> to vector<16xf32>
    %8 = vector.shape_cast %7 : vector<16xf32> to vector<16x1xf32>
    %cst_4 = arith.constant 2.560000e+02 : f32
    %9 = vector.broadcast %cst_4 : f32 to vector<16x1xf32>
    %10 = arith.divf %8, %9 : vector<16x1xf32>
    %cst_5 = arith.constant 9.99999993E-9 : f32
    %11 = vector.broadcast %cst_5 : f32 to vector<16x1xf32>
    %12 = arith.addf %10, %11 : vector<16x1xf32>
    %13 = math.sqrt %12 : vector<16x1xf32>
    %cst_6 = arith.constant dense<0xFF800000> : vector<16xf32>
    %14 = vector.multi_reduction <maximumf>, %4, %cst_6 [1] : vector<16x256xf32> to vector<16xf32>
    %15 = vector.shape_cast %14 : vector<16xf32> to vector<16x1xf32>
    %cst_7 = arith.constant dense<0x7F800000> : vector<16xf32>
    %16 = vector.multi_reduction <minimumf>, %4, %cst_7 [1] : vector<16x256xf32> to vector<16xf32>
    %17 = vector.shape_cast %16 : vector<16xf32> to vector<16x1xf32>
    %c0_8 = arith.constant 0 : index
    %c0_9 = arith.constant 0 : index
    %18 = vector.load %arg7[%c0_8, %c0_9] : memref<16x1xf32, #tpu.memory_space<vmem>>, vector<16x1xf32>
    %19 = arith.addf %18, %13 : vector<16x1xf32>
    %c0_10 = arith.constant 0 : index
    %c0_11 = arith.constant 0 : index
    %20 = vector.load %arg7[%c0_10, %c0_11] : memref<16x1xf32, #tpu.memory_space<vmem>>, vector<16x1xf32>
    tpu.vector_store %arg7[%c0_10, %c0_11], %19 {strides = array<i32>} : memref<16x1xf32, #tpu.memory_space<vmem>>, vector<16x1xf32>,
    %c0_12 = arith.constant 0 : index
    %c0_13 = arith.constant 0 : index
    %21 = vector.load %arg8[%c0_12, %c0_13] : memref<16x1xf32, #tpu.memory_space<vmem>>, vector<16x1xf32>
    %22 = arith.maximumf %21, %15 : vector<16x1xf32>
    %c0_14 = arith.constant 0 : index
    %c0_15 = arith.constant 0 : index
    %23 = vector.load %arg8[%c0_14, %c0_15] : memref<16x1xf32, #tpu.memory_space<vmem>>, vector<16x1xf32>
    tpu.vector_store %arg8[%c0_14, %c0_15], %22 {strides = array<i32>} : memref<16x1xf32, #tpu.memory_space<vmem>>, vector<16x1xf32>,
    %c0_16 = arith.constant 0 : index
    %c0_17 = arith.constant 0 : index
    %24 = vector.load %arg9[%c0_16, %c0_17] : memref<16x1xf32, #tpu.memory_space<vmem>>, vector<16x1xf32>
    %25 = arith.minimumf %24, %17 : vector<16x1xf32>
    %c0_18 = arith.constant 0 : index
    %c0_19 = arith.constant 0 : index
    %26 = vector.load %arg9[%c0_18, %c0_19] : memref<16x1xf32, #tpu.memory_space<vmem>>, vector<16x1xf32>
    tpu.vector_store %arg9[%c0_18, %c0_19], %25 {strides = array<i32>} : memref<16x1xf32, #tpu.memory_space<vmem>>, vector<16x1xf32>,
    %c1_i32 = arith.constant 1 : i32
    %27 = arith.cmpi eq, %arg1, %c1_i32 : i32
    %28 = arith.extui %27 : i1 to i32
    %c0_i32_20 = arith.constant 0 : i32
    %29 = arith.cmpi ne, %28, %c0_i32_20 : i32
    scf.if %29 {
      %c0_21 = arith.constant 0 : index
      %c0_22 = arith.constant 0 : index
      %30 = vector.load %arg7[%c0_21, %c0_22] : memref<16x1xf32, #tpu.memory_space<vmem>>, vector<16x1xf32>
      %cst_23 = arith.constant dense<0.000000e+00> : vector<1xf32>
      %31 = vector.multi_reduction <add>, %30, %cst_23 [0] : vector<16x1xf32> to vector<1xf32>
      %32 = vector.shape_cast %31 : vector<1xf32> to vector<1x1xf32>
      %33 = vector.shape_cast %32 : vector<1x1xf32> to vector<1x1x1xf32>
      %c0_24 = arith.constant 0 : index
      %c0_25 = arith.constant 0 : index
      %c0_26 = arith.constant 0 : index
      %34 = vector.load %arg4[%c0_24, %c0_25, %c0_26] : memref<1x1x1xf32, #tpu.memory_space<vmem>>, vector<1x1x1xf32>
      tpu.vector_store %arg4[%c0_24, %c0_25, %c0_26], %33 {strides = array<i32>} : memref<1x1x1xf32, #tpu.memory_space<vmem>>, vector<1x1x1xf32>,
      %c0_27 = arith.constant 0 : index
      %c0_28 = arith.constant 0 : index
      %35 = vector.load %arg8[%c0_27, %c0_28] : memref<16x1xf32, #tpu.memory_space<vmem>>, vector<16x1xf32>
      %cst_29 = arith.constant dense<0xFF800000> : vector<1xf32>
      %36 = vector.multi_reduction <maximumf>, %35, %cst_29 [0] : vector<16x1xf32> to vector<1xf32>
      %37 = vector.shape_cast %36 : vector<1xf32> to vector<1x1xf32>
      %38 = vector.shape_cast %37 : vector<1x1xf32> to vector<1x1x1xf32>
      %c0_30 = arith.constant 0 : index
      %c0_31 = arith.constant 0 : index
      %c0_32 = arith.constant 0 : index
      %39 = vector.load %arg5[%c0_30, %c0_31, %c0_32] : memref<1x1x1xf32, #tpu.memory_space<vmem>>, vector<1x1x1xf32>
      tpu.vector_store %arg5[%c0_30, %c0_31, %c0_32], %38 {strides = array<i32>} : memref<1x1x1xf32, #tpu.memory_space<vmem>>, vector<1x1x1xf32>,
      %c0_33 = arith.constant 0 : index
      %c0_34 = arith.constant 0 : index
      %40 = vector.load %arg9[%c0_33, %c0_34] : memref<16x1xf32, #tpu.memory_space<vmem>>, vector<16x1xf32>
      %cst_35 = arith.constant dense<0x7F800000> : vector<1xf32>
      %41 = vector.multi_reduction <minimumf>, %40, %cst_35 [0] : vector<16x1xf32> to vector<1xf32>
      %42 = vector.shape_cast %41 : vector<1xf32> to vector<1x1xf32>
      %43 = vector.shape_cast %42 : vector<1x1xf32> to vector<1x1x1xf32>
      %c0_36 = arith.constant 0 : index
      %c0_37 = arith.constant 0 : index
      %c0_38 = arith.constant 0 : index
      %44 = vector.load %arg6[%c0_36, %c0_37, %c0_38] : memref<1x1x1xf32, #tpu.memory_space<vmem>>, vector<1x1x1xf32>
      tpu.vector_store %arg6[%c0_36, %c0_37, %c0_38], %43 {strides = array<i32>} : memref<1x1x1xf32, #tpu.memory_space<vmem>>, vector<1x1x1xf32>,
    } else {
    }
    return
  }
  func.func @transform_0(%arg0: i32, %arg1: i32) -> (i32, i32) {
    %c2_i32 = arith.constant 2 : i32
    %0 = arith.muli %arg0, %c2_i32 : i32
    %1 = arith.addi %0, %arg1 : i32
    %c0_i32 = arith.constant 0 : i32
    %c0_i32_0 = arith.constant 0 : i32
    return %1, %c0_i32 : i32, i32
  }
  func.func @transform_1(%arg0: i32, %arg1: i32) -> (i32, i32) {
    %c2_i32 = arith.constant 2 : i32
    %0 = arith.muli %arg0, %c2_i32 : i32
    %1 = arith.addi %0, %arg1 : i32
    %c0_i32 = arith.constant 0 : i32
    %c0_i32_0 = arith.constant 0 : i32
    return %1, %c0_i32 : i32, i32
  }
  func.func @transform_2(%arg0: i32, %arg1: i32) -> (i32, i32, i32) {
    %c0_i32 = arith.constant 0 : i32
    %c0_i32_0 = arith.constant 0 : i32
    %c0_i32_1 = arith.constant 0 : i32
    return %arg0, %c0_i32, %c0_i32_0 : i32, i32, i32
  }
  func.func @transform_3(%arg0: i32, %arg1: i32) -> (i32, i32, i32) {
    %c0_i32 = arith.constant 0 : i32
    %c0_i32_0 = arith.constant 0 : i32
    %c0_i32_1 = arith.constant 0 : i32
    return %arg0, %c0_i32, %c0_i32_0 : i32, i32, i32
  }
  func.func @transform_4(%arg0: i32, %arg1: i32) -> (i32, i32, i32) {
    %c0_i32 = arith.constant 0 : i32
    %c0_i32_0 = arith.constant 0 : i32
    %c0_i32_1 = arith.constant 0 : i32
    return %arg0, %c0_i32, %c0_i32_0 : i32, i32, i32
  }
}

</mosaic_0001>

<llo_original>
// kernel: tpu_custom_call.1
$region0: #{tpu_custom_call.1}
  #allocation0 [shape = 'u32[]', space=smem, size = 0x4, offset = 0x4, fixed_abs, tag = 'smem constant byte address 0x4 - core index']
  #allocation1 [shape = 'u32[144,128]{1,0:T(1,128)}', space=vmem, size = 0x12000, scoped, tag = 'internal scratch']
  #allocation2 [shape = 'f32[16,1]{1,0:T(8,128)}', space=vmem, size = 0x2000, scoped, tag = 'scratch operand']
  #allocation3 [shape = 'f32[16,1]{1,0:T(8,128)}', space=vmem, size = 0x2000, scoped, tag = 'scratch operand']
  #allocation4 [shape = 'f32[16,1]{1,0:T(8,128)}', space=vmem, size = 0x2000, scoped, tag = 'scratch operand']
  %s0 = inlined_call_operand.hbm [shape: f32[64,256], index: 0, kind: input, shape index: {}]
  %s1 = inlined_call_operand.hbm [shape: f32[64,256], index: 1, kind: input, shape index: {}]
  %s2 = inlined_call_operand.vmem [shape: f32[2,1,1], index: 2, kind: output, shape index: {0}]
  %s3 = inlined_call_operand.vmem [shape: f32[2,1,1], index: 3, kind: output, shape index: {1}]
  %s4 = inlined_call_operand.vmem [shape: f32[2,1,1], index: 4, kind: output, shape index: {2}]
  %5 = xla_tuple %s2, %s3, %s4
  %s6 = sld [smem:[#allocation0]]
  $region73: #{tpu_custom_call.1} parent=0
    _
  %s8 = ssub.s32 1, %s6
  %s9 = scalar_select 0, %s8, %s6
  $region1: #{tpu_custom_call.1} parent=0
    #allocation5 [shape = 'u8[32768]{0}', space=vmem, size = 0x8000, scoped, tag = 'input window, operand 0']
    #allocation6 [shape = 's32[2]{0}', space=sflag, size = 0x8, scoped, tag = 'scoped memory for tpu_custom_call.1']
    #allocation7 [shape = 'u8[32768]{0}', space=vmem, size = 0x8000, scoped, tag = 'input window, operand 1']
    #allocation8 [shape = 's32[2]{0}', space=sflag, size = 0x8, scoped, tag = 'scoped memory for tpu_custom_call.1']
    %10 = vsyncpa [#allocation6], 0
    %s11 = scalar_lea.sflag [#allocation6], 1
    %12 = vsyncpa %s11, 0
    %13 = vsyncpa [#allocation8], 0
    %s14 = scalar_lea.sflag [#allocation8], 1
    %15 = vsyncpa %s14, 0
    loop: start=0, step=1, limit=6
    $region2: #{tpu_custom_call.1} parent=1 // loop_pre_header
      _
    $region3: #{tpu_custom_call.1} parent=1 // loop_header
      %s17 = sphi 0, %s21
      %p18 = scmp.ge.s32.totalorder %s17, 6
      %s24 = sphi 0, %s36
      %s25 = sphi 0, %s32
      %s26 = sphi 0, %s24
      %s27 = sphi 0, %s25
      %s28 = sphi 0, %s26
      %s29 = sphi 0, %s27
      %s43 = sphi 0, %s45
      %s46 = sphi 0, %s43
      %s47 = sphi 0, %s46
      %s63 = sphi 0, %s47
      %s73 = sphi 0, %s75
      %s76 = sphi 0, %s73
      %s77 = sphi 0, %s76
      %s93 = sphi 0, %s77
      %s99 = sphi 0, %s101
      %s102 = sphi 0, %s99
      %s103 = sphi 0, %s102
      %s119 = sphi 0, %s103
      %s125 = sphi 0, %s127
      %s128 = sphi 0, %s125
      %s129 = sphi 0, %s128
      %s145 = sphi 0, %s129
      %s151 = sphi 0, %s153
      %s154 = sphi 0, %s151
      %s155 = sphi 0, %s154
      %s171 = sphi 0, %s155
    $region4: #{tpu_custom_call.1} parent=1 // loop_header_branch
      %20 = sbr.rel (%p18) target = $region8
    $region5: #{tpu_custom_call.1} parent=1 // loop_body
      %s22 = ssub.s32 %s17, 1
      %s23 = ssub.s32 %s17, 2
      %s30 = sadd.s32 1, %s25
      %p31 = scmp.ge.s32.totalorder %s30, 2
      %s32 = scalar_select %p31, 0, %s30
      %s33 = sadd.s32 1, %s24
      %s34 = scalar_select %p31, %s33, %s24
      %p35 = scmp.ge.s32.totalorder %s34, 2
      %s36 = scalar_select %p35, 0, %s34
      %s37 = smul.u32 %s24, 2
      %s38 = sadd.s32 %s37, %s25
      %s39 = smul.u32 %s36, 2
      %s40 = sadd.s32 %s39, %s32
      %s41 = ssub.s32 %s38, %s40
      %p42 = scmp.eq.s32.totalorder %s41, 0
      %s44 = sadd.s32 %s43, 1
      %s45 = scalar_select %p42, %s43, %s44
      %p48 = pneg %p42
      %p49 = scmp.eq.s32.totalorder %s17, 3
      %p50 = por %p48, %p49
      %p51 = scmp.ne.s32.totalorder %s43, %s46
      %p52 = scmp.eq.s32.totalorder %s17, 0
      %p53 = por %p51, %p52
      %p54 = scmp.ne.s32.totalorder %s43, %s46
      %p55 = scmp.eq.s32.totalorder %s22, 3
      %p56 = por %p54, %p55
      %p57 = scmp.ne.s32.totalorder %s46, %s47
      %p58 = scmp.eq.s32.totalorder %s22, 0
      %p59 = por %p57, %p58
      %p60 = scmp.ne.s32.totalorder %s46, %s47
      %p61 = scmp.eq.s32.totalorder %s23, 3
      %p62 = por %p60, %p61
      %p64 = scmp.ne.s32.totalorder %s47, %s63
      %p65 = scmp.eq.s32.totalorder %s23, 0
      %p66 = por %p64, %p65
      %s67 = smul.u32 %s24, 2
      %s68 = sadd.s32 %s67, %s25
      %s69 = smul.u32 %s36, 2
      %s70 = sadd.s32 %s69, %s32
      %s71 = ssub.s32 %s68, %s70
      %p72 = scmp.eq.s32.totalorder %s71, 0
      %s74 = sadd.s32 %s73, 1
      %s75 = scalar_select %p72, %s73, %s74
      %p78 = pneg %p72
      %p79 = scmp.eq.s32.totalorder %s17, 3
      %p80 = por %p78, %p79
      %p81 = scmp.ne.s32.totalorder %s73, %s76
      %p82 = scmp.eq.s32.totalorder %s17, 0
      %p83 = por %p81, %p82
      %p84 = scmp.ne.s32.totalorder %s73, %s76
      %p85 = scmp.eq.s32.totalorder %s22, 3
      %p86 = por %p84, %p85
      %p87 = scmp.ne.s32.totalorder %s76, %s77
      %p88 = scmp.eq.s32.totalorder %s22, 0
      %p89 = por %p87, %p88
      %p90 = scmp.ne.s32.totalorder %s76, %s77
      %p91 = scmp.eq.s32.totalorder %s23, 3
      %p92 = por %p90, %p91
      %p94 = scmp.ne.s32.totalorder %s77, %s93
      %p95 = scmp.eq.s32.totalorder %s23, 0
      %p96 = por %p94, %p95
      %s97 = ssub.s32 %s24, %s36
      %p98 = scmp.eq.s32.totalorder %s97, 0
      %s100 = sadd.s32 %s99, 1
      %s101 = scalar_select %p98, %s99, %s100
      %p104 = pneg %p98
      %p105 = scmp.eq.s32.totalorder %s17, 3
      %p106 = por %p104, %p105
      %p107 = scmp.ne.s32.totalorder %s99, %s102
      %p108 = scmp.eq.s32.totalorder %s17, 0
      %p109 = por %p107, %p108
      %p110 = scmp.ne.s32.totalorder %s99, %s102
      %p111 = scmp.eq.s32.totalorder %s22, 3
      %p112 = por %p110, %p111
      %p113 = scmp.ne.s32.totalorder %s102, %s103
      %p114 = scmp.eq.s32.totalorder %s22, 0
      %p115 = por %p113, %p114
      %p116 = scmp.ne.s32.totalorder %s102, %s103
      %p117 = scmp.eq.s32.totalorder %s23, 3
      %p118 = por %p116, %p117
      %p120 = scmp.ne.s32.totalorder %s103, %s119
      %p121 = scmp.eq.s32.totalorder %s23, 0
      %p122 = por %p120, %p121
      %s123 = ssub.s32 %s24, %s36
      %p124 = scmp.eq.s32.totalorder %s123, 0
      %s126 = sadd.s32 %s125, 1
      %s127 = scalar_select %p124, %s125, %s126
      %p130 = pneg %p124
      %p131 = scmp.eq.s32.totalorder %s17, 3
      %p132 = por %p130, %p131
      %p133 = scmp.ne.s32.totalorder %s125, %s128
      %p134 = scmp.eq.s32.totalorder %s17, 0
      %p135 = por %p133, %p134
      %p136 = scmp.ne.s32.totalorder %s125, %s128
      %p137 = scmp.eq.s32.totalorder %s22, 3
      %p138 = por %p136, %p137
      %p139 = scmp.ne.s32.totalorder %s128, %s129
      %p140 = scmp.eq.s32.totalorder %s22, 0
      %p141 = por %p139, %p140
      %p142 = scmp.ne.s32.totalorder %s128, %s129
      %p143 = scmp.eq.s32.totalorder %s23, 3
      %p144 = por %p142, %p143
      %p146 = scmp.ne.s32.totalorder %s129, %s145
      %p147 = scmp.eq.s32.totalorder %s23, 0
      %p148 = por %p146, %p147
      %s149 = ssub.s32 %s24, %s36
      %p150 = scmp.eq.s32.totalorder %s149, 0
      %s152 = sadd.s32 %s151, 1
      %s153 = scalar_select %p150, %s151, %s152
      %p156 = pneg %p150
      %p157 = scmp.eq.s32.totalorder %s17, 3
      %p158 = por %p156, %p157
      %p159 = scmp.ne.s32.totalorder %s151, %s154
      %p160 = scmp.eq.s32.totalorder %s17, 0
      %p161 = por %p159, %p160
      %p162 = scmp.ne.s32.totalorder %s151, %s154
      %p163 = scmp.eq.s32.totalorder %s22, 3
      %p164 = por %p162, %p163
      %p165 = scmp.ne.s32.totalorder %s154, %s155
      %p166 = scmp.eq.s32.totalorder %s22, 0
      %p167 = por %p165, %p166
      %p168 = scmp.ne.s32.totalorder %s154, %s155
      %p169 = scmp.eq.s32.totalorder %s23, 3
      %p170 = por %p168, %p169
      %p172 = scmp.ne.s32.totalorder %s155, %s171
      %p173 = scmp.eq.s32.totalorder %s23, 0
      %p174 = por %p172, %p173
      %p175 = scmp.le.s32.totalorder 1, %s17
      %p176 = scmp.lt.s32.totalorder %s17, 5
      %p177 = pnand %p175, %p176
      %p178 = pneg %p177
      // Predicated region
      $region9: #{tpu_custom_call.1} parent=5 // pred_check
        _
      $region10: #{tpu_custom_call.1} parent=5 // pred_check_branch
        %180 = sbr.rel (%p177) target = $region12
      $region11: #{tpu_custom_call.1} parent=5 // pred_region
        %s181 = ssub.s32 %s17, 1
      $region12: #{tpu_custom_call.1} parent=5 // pred_fallthru
        _
      %p182 = scmp.lt.s32.totalorder %s17, 4
      // Predicated region
      $region13: #{tpu_custom_call.1} parent=5 // pred_check
        %p183 = pneg %p182
      $region14: #{tpu_custom_call.1} parent=5 // pred_check_branch
        %185 = sbr.rel (%p183) target = $region16
      $region15: #{tpu_custom_call.1} parent=5 // pred_region
        // Predicated region
        $region17: #{tpu_custom_call.1} parent=15 // pred_check
          %p186 = pneg %p53
        $region18: #{tpu_custom_call.1} parent=15 // pred_check_branch
          %188 = sbr.rel (%p186) target = $region20
        $region19: #{tpu_custom_call.1} parent=15 // pred_region
          %s189 = sand.u32 %s43, 1
          %s190 = scalar_lea.sflag [#allocation6], %s189
          %s191 = sand.u32 %s43, 1
          %s192 = smul.addr %s191, 32
          %s193 = scalar_lea.vmem [#allocation5], %s192
          %s194 = smul.u32 %s24, 2
          %s195 = sadd.s32 %s194, %s25
          %s196 = smul.u32 2, %s195
          %s198 = ssub.s32 512, 512
          %199 = vsyncadd %s190, %s198
          %s200 = smul.addr %s196, 2
          %s201 = smul.addr %s200, 128
          %s202 = scalar_lea.hbm %s0, %s201
          %s203 = sshll.u32 %s193, 4
          %s204 = int_to_ptr.vmem [resolvable:$true] %s203
          %209 = dma.hbm_to_vmem [thread:$0]  %s202, 512, %s204, %s190, 256, 256, 16
        $region20: #{tpu_custom_call.1} parent=15 // pred_fallthru
          _
        // Predicated region
        $region21: #{tpu_custom_call.1} parent=15 // pred_check
          %p210 = pneg %p83
        $region22: #{tpu_custom_call.1} parent=15 // pred_check_branch
          %212 = sbr.rel (%p210) target = $region24
        $region23: #{tpu_custom_call.1} parent=15 // pred_region
          %s213 = sand.u32 %s73, 1
          %s214 = scalar_lea.sflag [#allocation8], %s213
          %s215 = sand.u32 %s73, 1
          %s216 = smul.addr %s215, 32
          %s217 = scalar_lea.vmem [#allocation7], %s216
          %s218 = smul.u32 %s24, 2
          %s219 = sadd.s32 %s218, %s25
          %s220 = smul.u32 2, %s219
          %s222 = ssub.s32 512, 512
          %223 = vsyncadd %s214, %s222
          %s224 = smul.addr %s220, 2
          %s225 = smul.addr %s224, 128
          %s226 = scalar_lea.hbm %s1, %s225
          %s227 = sshll.u32 %s217, 4
          %s228 = int_to_ptr.vmem [resolvable:$true] %s227
          %233 = dma.hbm_to_vmem [thread:$0]  %s226, 512, %s228, %s214, 256, 256, 16
        $region24: #{tpu_custom_call.1} parent=15 // pred_fallthru
          _
      $region16: #{tpu_custom_call.1} parent=5 // pred_fallthru
        _
      %p234 = scmp.le.s32.totalorder 1, %s17
      %p235 = scmp.lt.s32.totalorder %s17, 5
      %p236 = pnand %p234, %p235
      %p237 = pneg %p236
      // Predicated region
      $region25: #{tpu_custom_call.1} parent=5 // pred_check
        _
      $region26: #{tpu_custom_call.1} parent=5 // pred_check_branch
        %239 = sbr.rel (%p236) target = $region28
      $region27: #{tpu_custom_call.1} parent=5 // pred_region
        %s240 = ssub.s32 %s17, 1
        %s241 = sand.u32 %s46, 1
        %s242 = scalar_lea.sflag [#allocation6], %s241
        %s243 = sand.u32 %s46, 1
        %s244 = smul.addr %s243, 32
        %s245 = scalar_lea.vmem [#allocation5], %s244
        // Predicated region
        $region29: #{tpu_custom_call.1} parent=27 // pred_check
          %p246 = pneg %p59
        $region30: #{tpu_custom_call.1} parent=27 // pred_check_branch
          %248 = sbr.rel (%p246) target = $region32
        $region31: #{tpu_custom_call.1} parent=27 // pred_region
          %249 = dma.done %s242, 512
        $region32: #{tpu_custom_call.1} parent=27 // pred_fallthru
          _
        %s250 = sand.u32 %s76, 1
        %s251 = scalar_lea.sflag [#allocation8], %s250
        %s252 = sand.u32 %s76, 1
        %s253 = smul.addr %s252, 32
        %s254 = scalar_lea.vmem [#allocation7], %s253
        // Predicated region
        $region33: #{tpu_custom_call.1} parent=27 // pred_check
          %p255 = pneg %p89
        $region34: #{tpu_custom_call.1} parent=27 // pred_check_branch
          %257 = sbr.rel (%p255) target = $region36
        $region35: #{tpu_custom_call.1} parent=27 // pred_region
          %258 = dma.done %s251, 512
        $region36: #{tpu_custom_call.1} parent=27 // pred_fallthru
          _
        %s259 = sand.u32 %s46, 1
        %s260 = scalar_lea.sflag [#allocation6], %s259
        %s261 = sand.u32 %s46, 1
        %s262 = smul.addr %s261, 32
        %s263 = scalar_lea.vmem [#allocation5], %s262
        %p264 = pneg %p59
        %p265 = pneg %p56
        %s266 = sand.u32 %s76, 1
        %s267 = scalar_lea.sflag [#allocation8], %s266
        %s268 = sand.u32 %s76, 1
        %s269 = smul.addr %s268, 32
        %s270 = scalar_lea.vmem [#allocation7], %s269
        %p271 = pneg %p89
        %p272 = pneg %p86
        %p273 = pneg %p115
        %p274 = pneg %p112
        %p275 = scmp.lt.s32.totalorder %s26, 1
        %s276 = scalar_select %p275, %s26, 1
        %s277 = scalar_lea.vmem %s2, %s276
        %p278 = pneg %p141
        %p279 = pneg %p138
        %p280 = scmp.lt.s32.totalorder %s26, 1
        %s281 = scalar_select %p280, %s26, 1
        %s282 = scalar_lea.vmem %s3, %s281
        %p283 = pneg %p167
        %p284 = pneg %p164
        %p285 = scmp.lt.s32.totalorder %s26, 1
        %s286 = scalar_select %p285, %s26, 1
        %s287 = scalar_lea.vmem %s4, %s286
        %s288 = smul.u32 %s26, 2
        %s289 = sadd.s32 %s288, %s27
        %s290 = smul.u32 2, %s289
        %s291 = smul.u32 %s26, 2
        %s292 = sadd.s32 %s291, %s27
        %s293 = smul.u32 2, %s292
        %p294 = scmp.lt.s32.totalorder %s26, 1
        %s295 = scalar_select %p294, %s26, 1
        %s296 = scalar_lea.vmem %s2, %s295
        %p297 = scmp.lt.s32.totalorder %s26, 1
        %s298 = scalar_select %p297, %s26, 1
        %s299 = scalar_lea.vmem %s3, %s298
        %p300 = scmp.lt.s32.totalorder %s26, 1
        %s301 = scalar_select %p300, %s26, 1
        %s302 = scalar_lea.vmem %s4, %s301
        %p303 = scmp.eq.s32.totalorder %s27, 0
        // Predicated region
        $region37: #{tpu_custom_call.1} parent=27 // pred_check
          %p304 = pneg %p303
        $region38: #{tpu_custom_call.1} parent=27 // pred_check_branch
          %306 = sbr.rel (%p304) target = $region40
        $region39: #{tpu_custom_call.1} parent=27 // pred_region
          %vm307 = vcmask 7168
          %308 = vst.msk [vmem:[#allocation2] sm:$0xff] %vm307, 0.0
          %309 = vst.msk [vmem:[#allocation2 + $0x8] sm:$0xff] %vm307, 0.0
          %310 = vst.msk [vmem:[#allocation3] sm:$0xff] %vm307, -inf
          %311 = vst.msk [vmem:[#allocation3 + $0x8] sm:$0xff] %vm307, -inf
          %312 = vst.msk [vmem:[#allocation4] sm:$0xff] %vm307, inf
          %313 = vst.msk [vmem:[#allocation4 + $0x8] sm:$0xff] %vm307, inf
        $region40: #{tpu_custom_call.1} parent=27 // pred_fallthru
          _
        %v314 = vld [vmem:[%s245] sm:$0xff]
        %v315 = vld [vmem:[%s245 + $0x8] sm:$0xff]
        %v316 = vld [vmem:[%s245 + $0x10] sm:$0xff]
        %v317 = vld [vmem:[%s245 + $0x18] sm:$0xff]
        %v318 = vld [vmem:[%s254] sm:$0xff]
        %v319 = vld [vmem:[%s254 + $0x8] sm:$0xff]
        %v320 = vld [vmem:[%s254 + $0x10] sm:$0xff]
        %v321 = vld [vmem:[%s254 + $0x18] sm:$0xff]
        %v322 = vsub.f32 %v314, %v318
        %v323 = vsub.f32 %v315, %v319
        %v324 = vsub.f32 %v316, %v320
        %v325 = vsub.f32 %v317, %v321
        %v326 = vmul.f32 %v322, %v322
        %v327 = vmul.f32 %v323, %v323
        %v328 = vmul.f32 %v324, %v324
        %v329 = vmul.f32 %v325, %v325
        %v330 = vadd.f32 %v326, %v327
        %331 = vadd.xlane.f32.xlu0 %v330
        %v332 = vpop.xlane.xlu0 %331
        %v333 = vadd.f32 %v328, %v329
        %334 = vadd.xlane.f32.xlu0 %v333
        %v335 = vpop.xlane.xlu0 %334
        %v336 = vrcp.pop 256.0
        %v337 = vmul.f32 %v332, %v336
        %v338 = vmul.f32 %v335, %v336
        %v339 = vadd.f32 %v337, 1e-08
        %v340 = vadd.f32 %v338, 1e-08
        %v341 = vrsqrt.pop %v339
        %v342 = vmul.f32 %v339, %v341
        %vm343 = vcmp.eq.f32.partialorder %v339, inf
        %v344 = vsel %vm343, %v339, %v342
        %vm345 = vcmp.eq.f32.partialorder %v339, 0.0
        %v346 = vand.u32 %v339, 2147483648
        %v347 = vsel %vm345, %v346, %v344
        %v348 = vrsqrt.pop %v340
        %v349 = vmul.f32 %v340, %v348
        %vm350 = vcmp.eq.f32.partialorder %v340, inf
        %v351 = vsel %vm350, %v340, %v349
        %vm352 = vcmp.eq.f32.partialorder %v340, 0.0
        %v353 = vand.u32 %v340, 2147483648
        %v354 = vsel %vm352, %v353, %v351
        %v355 = vmax.f32 %v318, %v319
        %356 = vmax.xlane.f32.xlu0 %v355
        %v357 = vpop.xlane.xlu0 %356
        %v358 = vmax.f32 %v320, %v321
        %359 = vmax.xlane.f32.xlu0 %v358
        %v360 = vpop.xlane.xlu0 %359
        %v361 = vmin.f32 %v318, %v319
        %362 = vmin.xlane.f32.xlu0 %v361
        %v363 = vpop.xlane.xlu0 %362
        %v364 = vmin.f32 %v320, %v321
        %365 = vmin.xlane.f32.xlu0 %v364
        %v366 = vpop.xlane.xlu0 %365
        %v367 = vld [vmem:[#allocation2] sm:$0xff]
        %v368 = vld [vmem:[#allocation2 + $0x8] sm:$0xff]
        %v369 = vadd.f32 %v367, %v347
        %v370 = vadd.f32 %v368, %v354
        %vm371 = vcmask 7168
        %372 = vst.msk [vmem:[#allocation2] sm:$0xff] %vm371, %v369
        %373 = vst.msk [vmem:[#allocation2 + $0x8] sm:$0xff] %vm371, %v370
        %v374 = vld [vmem:[#allocation3] sm:$0xff]
        %v375 = vld [vmem:[#allocation3 + $0x8] sm:$0xff]
        %v376 = vmax.f32 %v374, %v357
        %v377 = vmax.f32 %v375, %v360
        %378 = vst.msk [vmem:[#allocation3] sm:$0xff] %vm371, %v376
        %379 = vst.msk [vmem:[#allocation3 + $0x8] sm:$0xff] %vm371, %v377
        %v380 = vld [vmem:[#allocation4] sm:$0xff]
        %v381 = vld [vmem:[#allocation4 + $0x8] sm:$0xff]
        %v382 = vmin.f32 %v380, %v363
        %v383 = vmin.f32 %v381, %v366
        %384 = vst.msk [vmem:[#allocation4] sm:$0xff] %vm371, %v382
        %385 = vst.msk [vmem:[#allocation4 + $0x8] sm:$0xff] %vm371, %v383
        %p386 = scmp.eq.s32.totalorder %s27, 1
        // Predicated region
        $region41: #{tpu_custom_call.1} parent=27 // pred_check
          %p387 = pneg %p386
        $region42: #{tpu_custom_call.1} parent=27 // pred_check_branch
          %389 = sbr.rel (%p387) target = $region44
        $region43: #{tpu_custom_call.1} parent=27 // pred_region
          %v390 = vld [vmem:[#allocation2] sm:$0xff]
          %v391 = vld [vmem:[#allocation2 + $0x8] sm:$0xff]
          %v392 = vsel %vm371, %v390, 0.0
          %v393 = vsel %vm371, %v391, 0.0
          %v394 = vadd.f32 %v392, %v393
          %v395 = vrot.slane %v394, 4
          %v396 = vadd.f32 %v394, %v395
          %v397 = vrot.slane %v396, 2
          %v398 = vadd.f32 %v396, %v397
          %v399 = vrot.slane %v398, 1
          %v400 = vadd.f32 %v398, %v399
          %vm401 = vcmask 0
          %402 = vst.msk [vmem:[%s296] sm:$0x1] %vm401, %v400
          %v403 = vld [vmem:[#allocation3] sm:$0xff]
          %v404 = vld [vmem:[#allocation3 + $0x8] sm:$0xff]
          %v405 = vsel %vm371, %v403, -inf
          %v406 = vsel %vm371, %v404, -inf
          %v407 = vmax.f32 %v405, %v406
          %v408 = vrot.slane %v407, 4
          %v409 = vmax.f32 %v407, %v408
          %v410 = vrot.slane %v409, 2
          %v411 = vmax.f32 %v409, %v410
          %v412 = vrot.slane %v411, 1
          %v413 = vmax.f32 %v411, %v412
          %414 = vst.msk [vmem:[%s299] sm:$0x1] %vm401, %v413
          %v415 = vld [vmem:[#allocation4] sm:$0xff]
          %v416 = vld [vmem:[#allocation4 + $0x8] sm:$0xff]
          %v417 = vsel %vm371, %v415, inf
          %v418 = vsel %vm371, %v416, inf
          %v419 = vmin.f32 %v417, %v418
          %v420 = vrot.slane %v419, 4
          %v421 = vmin.f32 %v419, %v420
          %v422 = vrot.slane %v421, 2
          %v423 = vmin.f32 %v421, %v422
          %v424 = vrot.slane %v423, 1
          %v425 = vmin.f32 %v423, %v424
          %426 = vst.msk [vmem:[%s302] sm:$0x1] %vm401, %v425
        $region44: #{tpu_custom_call.1} parent=27 // pred_fallthru
          _
        %p427 = scmp.lt.s32.totalorder %s26, 1
        %s428 = scalar_select %p427, %s26, 1
        %s429 = scalar_lea.vmem %s2, %s428
        %p430 = scmp.lt.s32.totalorder %s26, 1
        %s431 = scalar_select %p430, %s26, 1
        %s432 = scalar_lea.vmem %s3, %s431
        %p433 = scmp.lt.s32.totalorder %s26, 1
        %s434 = scalar_select %p433, %s26, 1
        %s435 = scalar_lea.vmem %s4, %s434
        // Predicated region
        $region45: #{tpu_custom_call.1} parent=27 // pred_check
          %p436 = pneg %p112
        $region46: #{tpu_custom_call.1} parent=27 // pred_check_branch
          %438 = sbr.rel (%p436) target = $region48
        $region47: #{tpu_custom_call.1} parent=27 // pred_region
          _
        $region48: #{tpu_custom_call.1} parent=27 // pred_fallthru
          _
        // Predicated region
        $region49: #{tpu_custom_call.1} parent=27 // pred_check
          %p439 = pneg %p138
        $region50: #{tpu_custom_call.1} parent=27 // pred_check_branch
          %441 = sbr.rel (%p439) target = $region52
        $region51: #{tpu_custom_call.1} parent=27 // pred_region
          _
        $region52: #{tpu_custom_call.1} parent=27 // pred_fallthru
          _
        // Predicated region
        $region53: #{tpu_custom_call.1} parent=27 // pred_check
          %p442 = pneg %p164
        $region54: #{tpu_custom_call.1} parent=27 // pred_check_branch
          %444 = sbr.rel (%p442) target = $region56
        $region55: #{tpu_custom_call.1} parent=27 // pred_region
          _
        $region56: #{tpu_custom_call.1} parent=27 // pred_fallthru
          _
      $region28: #{tpu_custom_call.1} parent=5 // pred_fallthru
        _
      %p445 = scmp.le.s32.totalorder 2, %s17
      // Predicated region
      $region57: #{tpu_custom_call.1} parent=5 // pred_check
        %p446 = pneg %p445
      $region58: #{tpu_custom_call.1} parent=5 // pred_check_branch
        %448 = sbr.rel (%p446) target = $region60
      $region59: #{tpu_custom_call.1} parent=5 // pred_region
        %s449 = ssub.s32 %s17, 2
        // Predicated region
        $region61: #{tpu_custom_call.1} parent=59 // pred_check
          %p450 = pneg %p118
        $region62: #{tpu_custom_call.1} parent=59 // pred_check_branch
          %452 = sbr.rel (%p450) target = $region64
        $region63: #{tpu_custom_call.1} parent=59 // pred_region
          %p453 = scmp.lt.s32.totalorder %s28, 1
          %s454 = scalar_select %p453, %s28, 1
          %s455 = scalar_lea.vmem %s2, %s454
        $region64: #{tpu_custom_call.1} parent=59 // pred_fallthru
          _
        // Predicated region
        $region65: #{tpu_custom_call.1} parent=59 // pred_check
          %p456 = pneg %p144
        $region66: #{tpu_custom_call.1} parent=59 // pred_check_branch
          %458 = sbr.rel (%p456) target = $region68
        $region67: #{tpu_custom_call.1} parent=59 // pred_region
          %p459 = scmp.lt.s32.totalorder %s28, 1
          %s460 = scalar_select %p459, %s28, 1
          %s461 = scalar_lea.vmem %s3, %s460
        $region68: #{tpu_custom_call.1} parent=59 // pred_fallthru
          _
        // Predicated region
        $region69: #{tpu_custom_call.1} parent=59 // pred_check
          %p462 = pneg %p170
        $region70: #{tpu_custom_call.1} parent=59 // pred_check_branch
          %464 = sbr.rel (%p462) target = $region72
        $region71: #{tpu_custom_call.1} parent=59 // pred_region
          %p465 = scmp.lt.s32.totalorder %s28, 1
          %s466 = scalar_select %p465, %s28, 1
          %s467 = scalar_lea.vmem %s4, %s466
        $region72: #{tpu_custom_call.1} parent=59 // pred_fallthru
          _
      $region60: #{tpu_custom_call.1} parent=5 // pred_fallthru
        _
    $region6: #{tpu_custom_call.1} parent=1 // loop_footer
      %s21 = sadd.s32 1, %s17
    $region7: #{tpu_custom_call.1} parent=1 // loop_footer_branch
      %16 = sbr.rel target = $region3
    $region8: #{tpu_custom_call.1} parent=1 // loop_exit
      _
    %468 = vsyncpa [#allocation6], 1
    %s469 = scalar_lea.sflag [#allocation6], 1
    %470 = vsyncpa %s469, 1
    %471 = vsyncpa [#allocation8], 1
    %s472 = scalar_lea.sflag [#allocation8], 1
    %473 = vsyncpa %s472, 1

</llo_original>
